<compile_context>
chip_gen: v6e
topology: v6e:2x2x1
jax: 0.10.0
libtpu: 0.0.40
codegen_flags: <defaults>
</compile_context>

<pallas_src>
import functools

import jax
import jax.numpy as jnp
from jax.experimental import pallas as pl
from jax.experimental.pallas import tpu as pltpu

HEAD_LANES = 128   # lane-dense width of the fused head / output slab
HEAD_SPLIT = 64    # log_std columns start here; roll by 64 == -64 (mod 128)


def _round_up(n, m):
    return ((n + m - 1) // m) * m


# ----------------------------------------------------------------------------
# Kernel: full actor forward for one batch tile.  Weights stay resident in
# VMEM across grid steps; only the state tile and output tile stream.
# b_ref rows: 0 -> b0, 1 -> b1, 2 -> fused head bias, 3 -> padded noise.
# ----------------------------------------------------------------------------
def actor_kernel(state_ref, w0_ref, w1_ref, wh_ref, b_ref, out_ref):
    # hidden MLP:  relu( L1( relu( L0(x) ) ) )   (bf16 operands, f32 accumulate)
    x = state_ref[...].astype(jnp.bfloat16)                       # (TB, S_pad)
    h0 = jnp.dot(x, w0_ref[...], preferred_element_type=jnp.float32) + b_ref[0:1, :]
    h0 = jnp.maximum(h0, 0.0).astype(jnp.bfloat16)                # (TB, 128)
    h1 = jnp.dot(h0, w1_ref[...], preferred_element_type=jnp.float32) + b_ref[1:2, :]
    h1 = jnp.maximum(h1, 0.0).astype(jnp.bfloat16)                # (TB, 128)

    # fused mean/log_std head, lane-dense (TB, 128):
    #   lanes [0, A)        -> mean
    #   lanes [64, 64 + A)  -> log_std
    head = jnp.dot(h1, wh_ref[...], preferred_element_type=jnp.float32) + b_ref[2:3, :]

    mean = head
    log_std = pltpu.roll(head, shift=HEAD_SPLIT, axis=1)          # log_std -> lanes [0, A)
    log_std = jnp.clip(log_std, -20.0, 2.0)
    std = jnp.exp(log_std)

    # actions = Normal(0, ones(A)).sample() * std + mean  (single eps shared
    # over the batch, exactly like the PyTorch reference).
    actions = b_ref[3:4, :] * std + mean
    out_ref[...] = jnp.tanh(actions).astype(jnp.bfloat16)         # lanes >= A: don't-care


# ----------------------------------------------------------------------------
# Batch tiling: tb multiple of 8, tb * n_steps >= B.
#   B <  256 : one 8-aligned tile (inference path).
#   B <= 2048: exactly 2 grid steps (keeps both v7x TensorCores busy).
#   B >  2048: even number of <=1024-row tiles (amortizes grid-step overhead,
#              stays tiny in VMEM on every generation).
# ----------------------------------------------------------------------------
def _tile_plan(B):
    if B < 256:
        return _round_up(B, 8), 1
    if B <= 2048:
        return _round_up((B + 1) // 2, 8), 2
    n_steps = 2 * ((B + 2047) // 2048)
    return _round_up((B + n_steps - 1) // n_steps, 8), n_steps


# ----------------------------------------------------------------------------
# Jitted wrapper: pads batch/features, packs the (4,128) bias+noise operand,
# launches the kernel, and fuses the final slice + f32 cast.
# ----------------------------------------------------------------------------
@functools.partial(jax.jit, static_argnames=("action_size",))
def _actor_forward_jit(state, w0, w1, wh, b3, noise, *, action_size):
    B, S = state.shape
    S_pad = w0.shape[0]
    A = action_size

    tb, n_steps = _tile_plan(B)
    B_pad = tb * n_steps

    x = state
    if B_pad != B or S_pad != S:
        x = jnp.pad(state, ((0, B_pad - B), (0, S_pad - S)))

    noise_row = jnp.zeros((1, HEAD_LANES), jnp.float32).at[0, :A].set(noise)
    baux = jnp.concatenate([b3, noise_row], axis=0)               # (4,128)

    out = pl.pallas_call(
        actor_kernel,
        out_shape=jax.ShapeDtypeStruct((B_pad, HEAD_LANES), jnp.bfloat16),
        grid=(n_steps,),
        in_specs=[
            pl.BlockSpec((tb, S_pad), lambda i: (i, 0)),           # state: streamed over batch
            pl.BlockSpec((S_pad, 128), lambda i: (0, 0)),          # w0: resident
            pl.BlockSpec((128, 128), lambda i: (0, 0)),            # w1: resident
            pl.BlockSpec((128, HEAD_LANES), lambda i: (0, 0)),     # fused head weight: resident
            pl.BlockSpec((4, 128), lambda i: (0, 0)),              # packed biases + noise
        ],
        out_specs=pl.BlockSpec((tb, HEAD_LANES), lambda i: (i, 0)),
        compiler_params=pltpu.CompilerParams(
            dimension_semantics=("parallel",)),                    # shard batch across TCs (v7x)
    )(x, w0, w1, wh, baux)

    # fused inside this jit (no separate full-slab HBM pass)
    return out[:B, :A].astype(jnp.float32)


def actor_forward(state, params, noise):
    """state: (B, state_size) f32; noise: (action_size,) f32 shared over batch."""
    A = params["action_size"]
    assert A <= HEAD_SPLIT, "fused-head layout assumes action_size <= 64"
    return _actor_forward_jit(
        state, params["w0"], params["w1"], params["wh"], params["b3"],
        jnp.asarray(noise, jnp.float32), action_size=A)


# ----------------------------------------------------------------------------
# Deterministic parameter init mirroring layer_init (orthogonal * scale, zero
# bias).  Weights returned transposed to (in, out); matmul weights in bf16.
# NOTE for loaders of trained PyTorch weights: the fused head bias (b3 row 2)
# must use the same lane layout as wh: mean bias at lanes [0,A), log_std bias
# at lanes [64, 64+A).
# ----------------------------------------------------------------------------
def orthogonal_torch_like(key, out_features, in_features, scale=1.0):
    rows, cols = out_features, in_features
    a = jax.random.normal(key, (max(rows, cols), min(rows, cols)), dtype=jnp.float32)
    q, r = jnp.linalg.qr(a)
    q = q * jnp.sign(jnp.diag(r))
    if rows < cols:
        q = q.T
    w = q[:rows, :cols] * scale            # torch layout (out, in)
    return w.T.astype(jnp.float32)         # kernel layout (in, out)


def init_params(key, state_size, action_size):
    k0, k1, km, ks = jax.random.split(key, 4)
    w0 = orthogonal_torch_like(k0, 128, state_size, 1.0)       # fc layer 0
    w1 = orthogonal_torch_like(k1, 128, 128, 0.001)            # fc layer 1 (scale 0.001)
    wm = orthogonal_torch_like(km, action_size, 128, 1.0)      # mean_linear   (128, A)
    ws = orthogonal_torch_like(ks, action_size, 128, 1.0)      # log_std_linear(128, A)

    # zero-pad the first-layer contraction dim to a multiple of 16 (bf16 pack)
    s_pad = max(_round_up(state_size, 16), 16)
    w0p = jnp.zeros((s_pad, 128), jnp.float32).at[:state_size, :].set(w0)

    # fused, lane-padded head weight: mean at lanes [0,A), log_std at [64,64+A)
    wh = jnp.zeros((128, HEAD_LANES), jnp.float32)
    wh = wh.at[:, :action_size].set(wm)
    wh = wh.at[:, HEAD_SPLIT:HEAD_SPLIT + action_size].set(ws)

    return {
        "w0": w0p.astype(jnp.bfloat16),
        "w1": w1.astype(jnp.bfloat16),
        "wh": wh.astype(jnp.bfloat16),
        "b3": jnp.zeros((3, 128), jnp.float32),   # rows: b0, b1, fused head bias (zero init)
        "action_size": action_size,
    }


# Pure-JAX f32 reference (same bf16-quantized weights, f32 activations).
def reference_forward(state, params, noise):
    A = params["action_size"]
    S = state.shape[1]
    w0 = params["w0"].astype(jnp.float32)[:S]
    w1 = params["w1"].astype(jnp.float32)
    wh = params["wh"].astype(jnp.float32)
    b3 = params["b3"]
    h0 = jnp.maximum(state @ w0 + b3[0], 0.0)
    h1 = jnp.maximum(h0 @ w1 + b3[1], 0.0)
    head = h1 @ wh + b3[2]
    mean = head[:, :A]
    log_std = jnp.clip(head[:, HEAD_SPLIT:HEAD_SPLIT + A], -20.0, 2.0)
    std = jnp.exp(log_std)
    return jnp.tanh(noise[None, :] * std + mean)


# TODO(synk): forward() only returns actions; the log_prob branch of
# get_with_probabilities (and value/critic heads, log_alpha) is unused by
# the module's forward and is not computed here.

if __name__ == "__main__":
    state_size = 24
    action_size = 4
    batch = 8

    key = jax.random.PRNGKey(0)
    k_params, k_state, k_noise = jax.random.split(key, 3)

    params = init_params(k_params, state_size, action_size)
    state = jax.random.normal(k_state, (batch, state_size), dtype=jnp.float32)
    # torch.distributions.Normal(0, ones(action_size)).sample() -> (action_size,),
    # drawn once per forward call and broadcast over the batch.
    noise = jax.random.normal(k_noise, (action_size,), dtype=jnp.float32)

    out = actor_forward(state, params, noise)
    jax.block_until_ready(out)

    assert out.shape == (batch, action_size)
    assert bool(jnp.all(jnp.abs(out) <= 1.0))   # tanh range sanity check

    ref = reference_forward(state, params, noise)
    assert bool(jnp.max(jnp.abs(out - ref)) < 5e-2)   # bf16 activations/output tolerance

    print("KERNEL_OK")
</pallas_src>

<mosaic_0001>
module attributes {stable_mosaic.version = 11 : i64} {
  func.func @actor_kernel(%arg0: i32, %arg1: memref<8x32xf32, #tpu.memory_space<vmem>>, %arg2: memref<32x128xbf16, #tpu.memory_space<vmem>>, %arg3: memref<128x128xbf16, #tpu.memory_space<vmem>>, %arg4: memref<128x128xbf16, #tpu.memory_space<vmem>>, %arg5: memref<4x128xf32, #tpu.memory_space<vmem>>, %arg6: memref<8x128xbf16, #tpu.memory_space<vmem>>) attributes {dimension_semantics = [#tpu.dimension_semantics<parallel>], iteration_bounds = array<i64: 1>, scalar_prefetch = 0 : i64, scratch_operands = 0 : i64, tpu.core_type = #tpu.core_type<tc>, window_params = [{transform_indices = @transform_0, window_bounds = array<i64: 8, 32>}, {pipeline_mode = #tpu.pipeline_mode<synchronous>, transform_indices = @transform_1, window_bounds = array<i64: 32, 128>}, {pipeline_mode = #tpu.pipeline_mode<synchronous>, transform_indices = @transform_2, window_bounds = array<i64: 128, 128>}, {pipeline_mode = #tpu.pipeline_mode<synchronous>, transform_indices = @transform_3, window_bounds = array<i64: 128, 128>}, {pipeline_mode = #tpu.pipeline_mode<synchronous>, transform_indices = @transform_4, window_bounds = array<i64: 4, 128>}, {transform_indices = @transform_5, window_bounds = array<i64: 8, 128>}]} {
    %c0 = arith.constant 0 : index
    %c0_0 = arith.constant 0 : index
    %0 = vector.load %arg1[%c0, %c0_0] : memref<8x32xf32, #tpu.memory_space<vmem>>, vector<8x32xf32>
    %1 = arith.truncf %0 : vector<8x32xf32> to vector<8x32xbf16>
    %c0_1 = arith.constant 0 : index
    %c0_2 = arith.constant 0 : index
    %2 = vector.load %arg2[%c0_1, %c0_2] : memref<32x128xbf16, #tpu.memory_space<vmem>>, vector<32x128xbf16>
    %cst = arith.constant dense<0.000000e+00> : vector<8x128xf32>
    %3 = tpu.matmul %1, %2, %cst {dimension_numbers = #tpu.dot_dimension_numbers<[1], [0], [0], [1], [0, 0, 1, 1], [], []>} : vector<8x32xbf16>, vector<32x128xbf16>, vector<8x128xf32> -> vector<8x128xf32>
    %c0_3 = arith.constant 0 : index
    %c0_4 = arith.constant 0 : index
    %4 = vector.load %arg5[%c0_3, %c0_4] : memref<4x128xf32, #tpu.memory_space<vmem>>, vector<1x128xf32>
    %5 = vector.broadcast %4 : vector<1x128xf32> to vector<8x128xf32>
    %6 = arith.addf %3, %5 : vector<8x128xf32>
    %cst_5 = arith.constant 0.000000e+00 : f32
    %7 = vector.broadcast %cst_5 : f32 to vector<8x128xf32>
    %8 = arith.maximumf %6, %7 : vector<8x128xf32>
    %9 = arith.truncf %8 : vector<8x128xf32> to vector<8x128xbf16>
    %c0_6 = arith.constant 0 : index
    %c0_7 = arith.constant 0 : index
    %10 = vector.load %arg3[%c0_6, %c0_7] : memref<128x128xbf16, #tpu.memory_space<vmem>>, vector<128x128xbf16>
    %cst_8 = arith.constant dense<0.000000e+00> : vector<8x128xf32>
    %11 = tpu.matmul %9, %10, %cst_8 {dimension_numbers = #tpu.dot_dimension_numbers<[1], [0], [0], [1], [0, 0, 1, 1], [], []>} : vector<8x128xbf16>, vector<128x128xbf16>, vector<8x128xf32> -> vector<8x128xf32>
    %c1 = arith.constant 1 : index
    %c0_9 = arith.constant 0 : index
    %12 = vector.load %arg5[%c1, %c0_9] : memref<4x128xf32, #tpu.memory_space<vmem>>, vector<1x128xf32>
    %13 = vector.broadcast %12 : vector<1x128xf32> to vector<8x128xf32>
    %14 = arith.addf %11, %13 : vector<8x128xf32>
    %cst_10 = arith.constant 0.000000e+00 : f32
    %15 = vector.broadcast %cst_10 : f32 to vector<8x128xf32>
    %16 = arith.maximumf %14, %15 : vector<8x128xf32>
    %17 = arith.truncf %16 : vector<8x128xf32> to vector<8x128xbf16>
    %c0_11 = arith.constant 0 : index
    %c0_12 = arith.constant 0 : index
    %18 = vector.load %arg4[%c0_11, %c0_12] : memref<128x128xbf16, #tpu.memory_space<vmem>>, vector<128x128xbf16>
    %cst_13 = arith.constant dense<0.000000e+00> : vector<8x128xf32>
    %19 = tpu.matmul %17, %18, %cst_13 {dimension_numbers = #tpu.dot_dimension_numbers<[1], [0], [0], [1], [0, 0, 1, 1], [], []>} : vector<8x128xbf16>, vector<128x128xbf16>, vector<8x128xf32> -> vector<8x128xf32>
    %c2 = arith.constant 2 : index
    %c0_14 = arith.constant 0 : index
    %20 = vector.load %arg5[%c2, %c0_14] : memref<4x128xf32, #tpu.memory_space<vmem>>, vector<1x128xf32>
    %21 = vector.broadcast %20 : vector<1x128xf32> to vector<8x128xf32>
    %22 = arith.addf %19, %21 : vector<8x128xf32>
    %c64_i32 = arith.constant 64 : i32
    %23 = tpu.dynamic_rotate %22 by %c64_i32 dim 1 : vector<8x128xf32>, i32 -> vector<8x128xf32>
    %cst_15 = arith.constant -2.000000e+01 : f32
    %cst_16 = arith.constant 2.000000e+00 : f32
    %24 = vector.broadcast %cst_15 : f32 to vector<8x128xf32>
    %25 = arith.maximumf %24, %23 : vector<8x128xf32>
    %26 = vector.broadcast %cst_16 : f32 to vector<8x128xf32>
    %27 = arith.minimumf %26, %25 : vector<8x128xf32>
    %28 = math.exp %27 : vector<8x128xf32>
    %c3 = arith.constant 3 : index
    %c0_17 = arith.constant 0 : index
    %29 = vector.load %arg5[%c3, %c0_17] : memref<4x128xf32, #tpu.memory_space<vmem>>, vector<1x128xf32>
    %30 = vector.broadcast %29 : vector<1x128xf32> to vector<8x128xf32>
    %31 = arith.mulf %30, %28 : vector<8x128xf32>
    %32 = arith.addf %31, %22 : vector<8x128xf32>
    %33 = math.tanh %32 : vector<8x128xf32>
    %34 = arith.truncf %33 : vector<8x128xf32> to vector<8x128xbf16>
    %c0_18 = arith.constant 0 : index
    %c0_19 = arith.constant 0 : index
    %35 = vector.load %arg6[%c0_18, %c0_19] : memref<8x128xbf16, #tpu.memory_space<vmem>>, vector<8x128xbf16>
    tpu.vector_store %arg6[%c0_18, %c0_19], %34 {strides = array<i32>} : memref<8x128xbf16, #tpu.memory_space<vmem>>, vector<8x128xbf16>,
    return
  }
  func.func @transform_0(%arg0: i32) -> (i32, i32) {
    %c0_i32 = arith.constant 0 : i32
    %c0_i32_0 = arith.constant 0 : i32
    return %arg0, %c0_i32 : i32, i32
  }
  func.func @transform_1(%arg0: i32) -> (i32, i32) {
    %c0_i32 = arith.constant 0 : i32
    %c0_i32_0 = arith.constant 0 : i32
    %c0_i32_1 = arith.constant 0 : i32
    return %c0_i32, %c0_i32_0 : i32, i32
  }
  func.func @transform_2(%arg0: i32) -> (i32, i32) {
    %c0_i32 = arith.constant 0 : i32
    %c0_i32_0 = arith.constant 0 : i32
    %c0_i32_1 = arith.constant 0 : i32
    return %c0_i32, %c0_i32_0 : i32, i32
  }
  func.func @transform_3(%arg0: i32) -> (i32, i32) {
    %c0_i32 = arith.constant 0 : i32
    %c0_i32_0 = arith.constant 0 : i32
    %c0_i32_1 = arith.constant 0 : i32
    return %c0_i32, %c0_i32_0 : i32, i32
  }
  func.func @transform_4(%arg0: i32) -> (i32, i32) {
    %c0_i32 = arith.constant 0 : i32
    %c0_i32_0 = arith.constant 0 : i32
    %c0_i32_1 = arith.constant 0 : i32
    return %c0_i32, %c0_i32_0 : i32, i32
  }
  func.func @transform_5(%arg0: i32) -> (i32, i32) {
    %c0_i32 = arith.constant 0 : i32
    %c0_i32_0 = arith.constant 0 : i32
    return %arg0, %c0_i32 : i32, i32
  }
}

</mosaic_0001>

<llo_original>
// kernel: _actor_forward_jit.1
$region0: #{_actor_forward_jit.1}
  #allocation0 [shape = 'u32[]', space=smem, size = 0x4, offset = 0x4, fixed_abs, tag = 'smem constant byte address 0x4 - core index']
  #allocation1 [shape = 'u32[144,128]{1,0:T(1,128)}', space=vmem, size = 0x12000, scoped, tag = 'internal scratch']
  %s0 = inlined_call_operand.vmem [shape: f32[8,32], index: 0, kind: input, shape index: {}]
  %s1 = inlined_call_operand.vmem [shape: bf16[32,128], index: 1, kind: input, shape index: {}]
  %s2 = inlined_call_operand.hbm [shape: bf16[128,128], index: 2, kind: input, shape index: {}]
  %s3 = inlined_call_operand.hbm [shape: bf16[128,128], index: 3, kind: input, shape index: {}]
  %s4 = inlined_call_operand.vmem [shape: f32[4,128], index: 4, kind: input, shape index: {}]
  %s5 = inlined_call_operand.vmem [shape: bf16[8,128], index: 5, kind: output, shape index: {}]
  %s6 = sld [smem:[#allocation0]]
  $region38: #{_actor_forward_jit.1} parent=0
    _
  %s8 = ssub.s32 1, %s6
  %s9 = scalar_select 0, %s8, %s6
  $region1: #{_actor_forward_jit.1} parent=0
    #allocation2 [shape = 'u8[32768]{0}', space=vmem, size = 0x8000, scoped, tag = 'input window, operand 2, single buffered']
    #allocation3 [shape = 's32[1]{0}', space=sflag, size = 0x4, scoped, tag = 'scoped memory for _actor_forward_jit.1']
    #allocation4 [shape = 'u8[32768]{0}', space=vmem, size = 0x8000, scoped, tag = 'input window, operand 3, single buffered']
    #allocation5 [shape = 's32[1]{0}', space=sflag, size = 0x4, scoped, tag = 'scoped memory for _actor_forward_jit.1']
    %10 = vsyncpa [#allocation3], 0
    %11 = vsyncpa [#allocation5], 0
    // Predicated region
    $region2: #{_actor_forward_jit.1} parent=1 // pred_check
      _
    $region3: #{_actor_forward_jit.1} parent=1 // pred_check_branch
      %13 = sbr.rel (0) target = $region5
    $region4: #{_actor_forward_jit.1} parent=1 // pred_region
      _
    $region5: #{_actor_forward_jit.1} parent=1 // pred_fallthru
      _
    // Predicated region
    $region6: #{_actor_forward_jit.1} parent=1 // pred_check
      _
    $region7: #{_actor_forward_jit.1} parent=1 // pred_check_branch
      %15 = sbr.rel (0) target = $region9
    $region8: #{_actor_forward_jit.1} parent=1 // pred_region
      _
    $region9: #{_actor_forward_jit.1} parent=1 // pred_fallthru
      _
    // Predicated region
    $region10: #{_actor_forward_jit.1} parent=1 // pred_check
      _
    $region11: #{_actor_forward_jit.1} parent=1 // pred_check_branch
      %17 = sbr.rel (0) target = $region13
    $region12: #{_actor_forward_jit.1} parent=1 // pred_region
      %s19 = ssub.s32 1024, 1024
      %20 = vsyncadd [#allocation3], %s19
      %s21 = sshll.u32 [#allocation2], 4
      %s22 = int_to_ptr.vmem [resolvable:$true] %s21
      %27 = dma.hbm_to_vmem [thread:$0]  %s2, 1024, %s22, [#allocation3], 64, 64, 4
    $region13: #{_actor_forward_jit.1} parent=1 // pred_fallthru
      _
    // Predicated region
    $region14: #{_actor_forward_jit.1} parent=1 // pred_check
      _
    $region15: #{_actor_forward_jit.1} parent=1 // pred_check_branch
      %29 = sbr.rel (0) target = $region17
    $region16: #{_actor_forward_jit.1} parent=1 // pred_region
      %s31 = ssub.s32 1024, 1024
      %32 = vsyncadd [#allocation5], %s31
      %s33 = sshll.u32 [#allocation4], 4
      %s34 = int_to_ptr.vmem [resolvable:$true] %s33
      %39 = dma.hbm_to_vmem [thread:$0]  %s3, 1024, %s34, [#allocation5], 64, 64, 4
    $region17: #{_actor_forward_jit.1} parent=1 // pred_fallthru
      _
    // Predicated region
    $region18: #{_actor_forward_jit.1} parent=1 // pred_check
      _
    $region19: #{_actor_forward_jit.1} parent=1 // pred_check_branch
      %41 = sbr.rel (0) target = $region21
    $region20: #{_actor_forward_jit.1} parent=1 // pred_region
      _
    $region21: #{_actor_forward_jit.1} parent=1 // pred_fallthru
      _
    // Predicated region
    $region22: #{_actor_forward_jit.1} parent=1 // pred_check
      _
    $region23: #{_actor_forward_jit.1} parent=1 // pred_check_branch
      %43 = sbr.rel (0) target = $region25
    $region24: #{_actor_forward_jit.1} parent=1 // pred_region
      %44 = dma.done [#allocation3], 1024
    $region25: #{_actor_forward_jit.1} parent=1 // pred_fallthru
      _
    // Predicated region
    $region26: #{_actor_forward_jit.1} parent=1 // pred_check
      _
    $region27: #{_actor_forward_jit.1} parent=1 // pred_check_branch
      %46 = sbr.rel (0) target = $region29
    $region28: #{_actor_forward_jit.1} parent=1 // pred_region
      %47 = dma.done [#allocation5], 1024
    $region29: #{_actor_forward_jit.1} parent=1 // pred_fallthru
      _
    %v49 = vld [vmem:[%s0] sm:$0xff]
    %v50 = vpack.c.bf16 %v49, %v49
    %v51 = vld [vmem:[%s1] sm:$0xf]
    %v52 = vld [vmem:[%s1 + $0x4] sm:$0xf]
    %v53 = vld [vmem:[%s1 + $0x8] sm:$0xf]
    %v54 = vld [vmem:[%s1 + $0xc] sm:$0xf]
    %v55 = vld [vmem:[%s4] sm:$0x1]
    %v56 = vlaneseq
    %v57 = vshrl.u32 %v56, 7
    %v58 = vsub.s32 0, %v57
    %v59 = vrot.slane %v55, %v58
    %v64 = vunpack.c.l.b16 %v51
    %v65 = vunpack.c.l.b16 %v52
    %v66 = vunpack.c.l.b16 %v53
    %v67 = vunpack.c.l.b16 %v54
    %v68 = vpack.c.b16 %v65, %v64
    %v69 = vpack.c.b16 %v67, %v66
    %vm72 = vcmask 261120
    %v74 = vsel %vm72, %v50, 0
    %76 = vmatprep.subr.bf16.mxu0 0
    %77 = vmatpush1.bf16.msra.mxu0 0
    %78 = vmatprep.subr.bf16.mxu0 0
    %79 = vmatpush1.bf16.msra.mxu0 0
    %80 = vmatprep.subr.bf16.mxu0 0
    %81 = vmatpush1.bf16.msra.mxu0 0
    %82 = vmatprep.subr.bf16.mxu0 0
    %83 = vmatpush1.bf16.msra.mxu0 0
    %84 = vmatprep.subr.bf16.mxu0 0
    %85 = vmatpush1.bf16.msra.mxu0 0
    %86 = vmatprep.subr.bf16.mxu0 0
    %87 = vmatpush1.bf16.msra.mxu0 0
    %88 = vmatprep.subr.bf16.mxu0 0
    %89 = vmatpush1.bf16.msra.mxu0 %v69
    %90 = vmatprep.subr.bf16.mxu0 0
    %91 = vmatpush1.bf16.msra.mxu0 %v68
    %92 = vmatprep.subr.bf16.mxu0 0
    %93 = vmatpush2.bf16.msra.mxu0 0
    %94 = vmatprep.subr.bf16.mxu0 0
    %95 = vmatpush2.bf16.msra.mxu0 0
    %96 = vmatprep.subr.bf16.mxu0 0
    %97 = vmatpush2.bf16.msra.mxu0 0
    %98 = vmatprep.subr.bf16.mxu0 0
    %99 = vmatpush2.bf16.msra.mxu0 0
    %100 = vmatprep.subr.bf16.mxu0 0
    %101 = vmatpush2.bf16.msra.mxu0 0
    %102 = vmatprep.subr.bf16.mxu0 0
    %103 = vmatpush2.bf16.msra.mxu0 0
    %104 = vmatprep.subr.bf16.mxu0 0
    %105 = vmatpush2.bf16.msra.mxu0 0
    %106 = vmatprep.subr.bf16.mxu0 0
    %107 = vmatpush2.bf16.msra.mxu0 0
    %108 = vmatprep.mubr.bf16.mxu0 0
    %109 = vmatmul.mubr.bf16.gmra.mxu0 %v74
    %v110 = vpop.f32.mrf.mxu0
    %v111 = vadd.f32 %v59, %v110
    %v112 = vpop.f32.mrf.mxu0
    %v113 = vpop.f32.mrf.mxu0
    %v114 = vpop.f32.mrf.mxu0
    %115 = vdwg.mxu0
    %v116 = vmax.f32 %v111, 0.0
    %v117 = vpack.c.bf16 %v116, %v116
    %v118 = vld [vmem:[#allocation2] sm:$0xf]
    %v119 = vld [vmem:[#allocation2 + $0x4] sm:$0xf]
    %v120 = vld [vmem:[#allocation2 + $0x8] sm:$0xf]
    %v121 = vld [vmem:[#allocation2 + $0xc] sm:$0xf]
    %v122 = vld [vmem:[#allocation2 + $0x10] sm:$0xf]
    %v123 = vld [vmem:[#allocation2 + $0x14] sm:$0xf]
    %v124 = vld [vmem:[#allocation2 + $0x18] sm:$0xf]
    %v125 = vld [vmem:[#allocation2 + $0x1c] sm:$0xf]
    %v126 = vld [vmem:[#allocation2 + $0x20] sm:$0xf]
    %v127 = vld [vmem:[#allocation2 + $0x24] sm:$0xf]
    %v128 = vld [vmem:[#allocation2 + $0x28] sm:$0xf]
    %v129 = vld [vmem:[#allocation2 + $0x2c] sm:$0xf]
    %v130 = vld [vmem:[#allocation2 + $0x30] sm:$0xf]
    %v131 = vld [vmem:[#allocation2 + $0x34] sm:$0xf]
    %v132 = vld [vmem:[#allocation2 + $0x38] sm:$0xf]
    %v133 = vld [vmem:[#allocation2 + $0x3c] sm:$0xf]
    %v134 = vld [vmem:[%s4 + $0x1] sm:$0x1]
    %v135 = vlaneseq
    %v136 = vshrl.u32 %v135, 7
    %v137 = vsub.s32 0, %v136
    %v138 = vrot.slane %v134, %v137
    %v155 = vunpack.c.l.b16 %v118
    %v156 = vunpack.c.l.b16 %v119
    %v157 = vunpack.c.l.b16 %v120
    %v158 = vunpack.c.l.b16 %v121
    %v159 = vunpack.c.l.b16 %v122
    %v160 = vunpack.c.l.b16 %v123
    %v161 = vunpack.c.l.b16 %v124
    %v162 = vunpack.c.l.b16 %v125
    %v163 = vunpack.c.l.b16 %v126
    %v164 = vunpack.c.l.b16 %v127
    %v165 = vunpack.c.l.b16 %v128
    %v166 = vunpack.c.l.b16 %v129
    %v167 = vunpack.c.l.b16 %v130
    %v168 = vunpack.c.l.b16 %v131
    %v169 = vunpack.c.l.b16 %v132
    %v170 = vunpack.c.l.b16 %v133
    %v171 = vpack.c.b16 %v156, %v155
    %v172 = vpack.c.b16 %v158, %v157
    %v173 = vpack.c.b16 %v160, %v159
    %v174 = vpack.c.b16 %v162, %v161
    %v175 = vpack.c.b16 %v164, %v163
    %v176 = vpack.c.b16 %v166, %v165
    %v177 = vpack.c.b16 %v168, %v167
    %v178 = vpack.c.b16 %v170, %v169
    %187 = vmatprep.subr.bf16.mxu0 0
    %188 = vmatpush1.bf16.msra.mxu0 %v178
    %189 = vmatprep.subr.bf16.mxu0 0
    %190 = vmatpush1.bf16.msra.mxu0 %v177
    %191 = vmatprep.subr.bf16.mxu0 0
    %192 = vmatpush1.bf16.msra.mxu0 %v176
    %193 = vmatprep.subr.bf16.mxu0 0
    %194 = vmatpush1.bf16.msra.mxu0 %v175
    %195 = vmatprep.subr.bf16.mxu0 0
    %196 = vmatpush1.bf16.msra.mxu0 %v174
    %197 = vmatprep.subr.bf16.mxu0 0
    %198 = vmatpush1.bf16.msra.mxu0 %v173
    %199 = vmatprep.subr.bf16.mxu0 0
    %200 = vmatpush1.bf16.msra.mxu0 %v172
    %201 = vmatprep.subr.bf16.mxu0 0
    %202 = vmatpush1.bf16.msra.mxu0 %v171
    %203 = vmatprep.subr.bf16.mxu0 0
    %204 = vmatpush2.bf16.msra.mxu0 0
    %205 = vmatprep.subr.bf16.mxu0 0
    %206 = vmatpush2.bf16.msra.mxu0 0
    %207 = vmatprep.subr.bf16.mxu0 0
    %208 = vmatpush2.bf16.msra.mxu0 0
    %209 = vmatprep.subr.bf16.mxu0 0
    %210 = vmatpush2.bf16.msra.mxu0 0
    %211 = vmatprep.subr.bf16.mxu0 0
    %212 = vmatpush2.bf16.msra.mxu0 0
    %213 = vmatprep.subr.bf16.mxu0 0
    %214 = vmatpush2.bf16.msra.mxu0 0
    %215 = vmatprep.subr.bf16.mxu0 0
    %216 = vmatpush2.bf16.msra.mxu0 0
    %217 = vmatprep.subr.bf16.mxu0 0
    %218 = vmatpush2.bf16.msra.mxu0 0
    %219 = vmatprep.mubr.bf16.mxu0 0
    %220 = vmatmul.mubr.bf16.gmra.mxu0 %v117
    %v221 = vpop.f32.mrf.mxu0
    %v222 = vadd.f32 %v138, %v221
    %v223 = vpop.f32.mrf.mxu0
    %v224 = vpop.f32.mrf.mxu0
    %v225 = vpop.f32.mrf.mxu0
    %226 = vdwg.mxu0
    %v227 = vmax.f32 %v222, 0.0
    %v228 = vpack.c.bf16 %v227, %v227
    %v229 = vld [vmem:[#allocation4] sm:$0xf]
    %v230 = vld [vmem:[#allocation4 + $0x4] sm:$0xf]
    %v231 = vld [vmem:[#allocation4 + $0x8] sm:$0xf]
    %v232 = vld [vmem:[#allocation4 + $0xc] sm:$0xf]
    %v233 = vld [vmem:[#allocation4 + $0x10] sm:$0xf]
    %v234 = vld [vmem:[#allocation4 + $0x14] sm:$0xf]
    %v235 = vld [vmem:[#allocation4 + $0x18] sm:$0xf]
    %v236 = vld [vmem:[#allocation4 + $0x1c] sm:$0xf]
    %v237 = vld [vmem:[#allocation4 + $0x20] sm:$0xf]
    %v238 = vld [vmem:[#allocation4 + $0x24] sm:$0xf]
    %v239 = vld [vmem:[#allocation4 + $0x28] sm:$0xf]
    %v240 = vld [vmem:[#allocation4 + $0x2c] sm:$0xf]
    %v241 = vld [vmem:[#allocation4 + $0x30] sm:$0xf]
    %v242 = vld [vmem:[#allocation4 + $0x34] sm:$0xf]
    %v243 = vld [vmem:[#allocation4 + $0x38] sm:$0xf]
    %v244 = vld [vmem:[#allocation4 + $0x3c] sm:$0xf]
    %v245 = vld [vmem:[%s4 + $0x2] sm:$0x1]
    %v246 = vlaneseq
    %v247 = vshrl.u32 %v246, 7
    %v248 = vsub.s32 0, %v247
    %v249 = vrot.slane %v245, %v248
    %v266 = vunpack.c.l.b16 %v229
    %v267 = vunpack.c.l.b16 %v230
    %v268 = vunpack.c.l.b16 %v231
    %v269 = vunpack.c.l.b16 %v232
    %v270 = vunpack.c.l.b16 %v233
    %v271 = vunpack.c.l.b16 %v234
    %v272 = vunpack.c.l.b16 %v235
    %v273 = vunpack.c.l.b16 %v236
    %v274 = vunpack.c.l.b16 %v237
    %v275 = vunpack.c.l.b16 %v238
    %v276 = vunpack.c.l.b16 %v239
    %v277 = vunpack.c.l.b16 %v240
    %v278 = vunpack.c.l.b16 %v241
    %v279 = vunpack.c.l.b16 %v242
    %v280 = vunpack.c.l.b16 %v243
    %v281 = vunpack.c.l.b16 %v244
    %v282 = vpack.c.b16 %v267, %v266
    %v283 = vpack.c.b16 %v269, %v268
    %v284 = vpack.c.b16 %v271, %v270
    %v285 = vpack.c.b16 %v273, %v272
    %v286 = vpack.c.b16 %v275, %v274
    %v287 = vpack.c.b16 %v277, %v276
    %v288 = vpack.c.b16 %v279, %v278
    %v289 = vpack.c.b16 %v281, %v280
    %298 = vmatprep.subr.bf16.mxu0 0
    %299 = vmatpush1.bf16.msra.mxu0 %v289
    %300 = vmatprep.subr.bf16.mxu0 0
    %301 = vmatpush1.bf16.msra.mxu0 %v288
    %302 = vmatprep.subr.bf16.mxu0 0
    %303 = vmatpush1.bf16.msra.mxu0 %v287
    %304 = vmatprep.subr.bf16.mxu0 0
    %305 = vmatpush1.bf16.msra.mxu0 %v286
    %306 = vmatprep.subr.bf16.mxu0 0
    %307 = vmatpush1.bf16.msra.mxu0 %v285
    %308 = vmatprep.subr.bf16.mxu0 0
    %309 = vmatpush1.bf16.msra.mxu0 %v284
    %310 = vmatprep.subr.bf16.mxu0 0
    %311 = vmatpush1.bf16.msra.mxu0 %v283
    %312 = vmatprep.subr.bf16.mxu0 0
    %313 = vmatpush1.bf16.msra.mxu0 %v282
    %314 = vmatprep.subr.bf16.mxu0 0
    %315 = vmatpush2.bf16.msra.mxu0 0
    %316 = vmatprep.subr.bf16.mxu0 0
    %317 = vmatpush2.bf16.msra.mxu0 0
    %318 = vmatprep.subr.bf16.mxu0 0
    %319 = vmatpush2.bf16.msra.mxu0 0
    %320 = vmatprep.subr.bf16.mxu0 0
    %321 = vmatpush2.bf16.msra.mxu0 0
    %322 = vmatprep.subr.bf16.mxu0 0
    %323 = vmatpush2.bf16.msra.mxu0 0
    %324 = vmatprep.subr.bf16.mxu0 0
    %325 = vmatpush2.bf16.msra.mxu0 0
    %326 = vmatprep.subr.bf16.mxu0 0
    %327 = vmatpush2.bf16.msra.mxu0 0
    %328 = vmatprep.subr.bf16.mxu0 0
    %329 = vmatpush2.bf16.msra.mxu0 0
    %330 = vmatprep.mubr.bf16.mxu0 0
    %331 = vmatmul.mubr.bf16.gmra.mxu0 %v228
    %v332 = vpop.f32.mrf.mxu0
    %v333 = vadd.f32 %v249, %v332
    %v334 = vpop.f32.mrf.mxu0
    %v335 = vpop.f32.mrf.mxu0
    %v336 = vpop.f32.mrf.mxu0
    %337 = vdwg.mxu0
    %338 = vrot.lane.b32.xlu0 %v333, 64
    %v339 = vpop.permute.xlu0 %338
    %v340 = vmax.f32 %v339, -20.0
    %v341 = vmin.f32 %v340, 2.0
    %v342 = vmul.f32 %v341, 1.442695
    %v343 = vpow.pop %v342
    %v344 = vld [vmem:[%s4 + $0x3] sm:$0x1]
    %v345 = vlaneseq
    %v346 = vshrl.u32 %v345, 7
    %v347 = vsub.s32 0, %v346
    %v348 = vrot.slane %v344, %v347
    %v349 = vmul.f32 %v348, %v343
    %v350 = vadd.f32 %v349, %v333
    %v351 = vtanh.pop %v350
    %v352 = vpack.c.bf16 %v351, %v351
    %353 = vst [vmem:[%s5] sm:$0xf] %v352
    // Predicated region
    $region30: #{_actor_forward_jit.1} parent=1 // pred_check
      _
    $region31: #{_actor_forward_jit.1} parent=1 // pred_check_branch
      %355 = sbr.rel (0) target = $region33
    $region32: #{_actor_forward_jit.1} parent=1 // pred_region
      _
    $region33: #{_actor_forward_jit.1} parent=1 // pred_fallthru
      _
    // Predicated region
    $region34: #{_actor_forward_jit.1} parent=1 // pred_check
      _
    $region35: #{_actor_forward_jit.1} parent=1 // pred_check_branch
      %357 = sbr.rel (0) target = $region37
    $region36: #{_actor_forward_jit.1} parent=1 // pred_region
      _
    $region37: #{_actor_forward_jit.1} parent=1 // pred_fallthru
      _
    %358 = vsyncpa [#allocation3], 1
    %359 = vsyncpa [#allocation5], 1

</llo_original>
